<compile_context>
chip_gen: v5e
topology: v5e:2x2
jax: 0.10.0
libtpu: 0.0.40
codegen_flags: <defaults>
</compile_context>

<pallas_src>
import functools

import jax
import jax.numpy as jnp
import numpy as np
from jax.experimental import pallas as pl
from jax.experimental.pallas import tpu as pltpu


def _mha_kernel(return_attn, q_ref, k_ref, v_ref, w_hbm, p_ref, *rest):
    # q/k/v refs: (bb, L, D) input blocks (f32).
    # w_hbm: (4, D, D) packed [Wq, Wk, Wv, Wfc] in (in, out) layout, left in HBM.
    # p_ref: (5, D) packed rows [bq, bk, bv, gamma, beta] (f32).
    if return_attn:
        out_ref, attn_ref, w_vmem, dma_sem = rest
    else:
        out_ref, w_vmem, dma_sem = rest
        attn_ref = None

    bb, L, D = q_ref.shape
    mm_dtype = w_vmem.dtype          # matmul operand dtype (f32 or bf16)

    # Stage the invariant weight slab HBM -> VMEM, single-buffered (half the
    # VMEM of a double-buffered BlockSpec operand).  Issued every grid step so
    # it is megacore-safe; grids here are 1-2 steps.
    cp = pltpu.make_async_copy(w_hbm, w_vmem, dma_sem)
    cp.start()
    cp.wait()

    # Flatten batch*seq rows for the projections (leading-dim reshape only,
    # no lane/sublane data movement) -> bigger MXU tiles, fewer matmul calls.
    qf = q_ref[...].reshape(bb * L, D).astype(jnp.float32)
    kf = k_ref[...].reshape(bb * L, D).astype(jnp.float32)
    vf = v_ref[...].reshape(bb * L, D).astype(jnp.float32)

    p = p_ref[...].astype(jnp.float32)
    b_q, b_k, b_v = p[0:1, :], p[1:2, :], p[2:3, :]
    gamma, beta = p[3:4, :], p[4:5, :]

    scale = D ** -0.5

    # Projections: cast operands to mm_dtype at the MXU boundary, accumulate f32.
    qp = jnp.dot(qf.astype(mm_dtype), w_vmem[0],
                 preferred_element_type=jnp.float32) + b_q
    qp = qp * scale                          # fold softmax scale into q (L*D, not L*L)
    kp = jnp.dot(kf.astype(mm_dtype), w_vmem[1],
                 preferred_element_type=jnp.float32) + b_k
    vp = jnp.dot(vf.astype(mm_dtype), w_vmem[2],
                 preferred_element_type=jnp.float32) + b_v

    qp3 = qp.reshape(bb, L, D).astype(mm_dtype)
    kp3 = kp.reshape(bb, L, D).astype(mm_dtype)
    vp3 = vp.reshape(bb, L, D).astype(mm_dtype)

    # Batched Q @ K^T contracting the last axes directly (no explicit .T).
    scores = jnp.einsum("bld,bmd->blm", qp3, kp3,
                        preferred_element_type=jnp.float32)

    # Softmax over keys (torch Softmax(dim=2)), in f32; dropout p=0.0 -> identity.
    # Exact division: returned attention rows sum to 1 and match the reference.
    m = jnp.max(scores, axis=-1, keepdims=True)
    e = jnp.exp(scores - m)
    denom = jnp.sum(e, axis=-1, keepdims=True)
    attn = e / denom

    ctx = jnp.einsum("blm,bmd->bld", attn.astype(mm_dtype), vp3,
                     preferred_element_type=jnp.float32)

    # Output projection (bias-free) + residual + LayerNorm(eps=1e-6), all f32.
    proj = jnp.dot(ctx.reshape(bb * L, D).astype(mm_dtype), w_vmem[3],
                   preferred_element_type=jnp.float32)
    x = proj + qf                            # residual = pre-projection q
    mean = jnp.mean(x, axis=-1, keepdims=True)
    xc = x - mean
    var = jnp.mean(xc * xc, axis=-1, keepdims=True)
    y = xc * jax.lax.rsqrt(var + 1e-6) * gamma + beta

    out_ref[...] = y.astype(out_ref.dtype)   # (bb*L, D) flat rows
    if return_attn:
        attn_ref[...] = attn.astype(attn_ref.dtype)   # (bb, L, L)


def multi_head_attention(q, k, v, params, *, batch_block=None, use_bf16=False,
                         return_attn=True, attn_dtype=jnp.float32):
    """q, k, v: [B, L, D] float32; params: dict of projection weights.

    batch_block = B     -> grid=(1,), single invocation: best on single-TC
                           v5e/v6e (no per-step overhead, biggest MXU M-tile).
    batch_block = B//2  -> grid=(2,), "parallel": one step per v7x TensorCore.
    use_bf16            -> bf16 MXU operands / bf16 weight slab, f32 accumulate,
                           f32 softmax + LayerNorm.
    return_attn=False   -> skip the B*L*L attention writeback entirely.
    """
    B, L, D = q.shape
    if batch_block is None:
        batch_block = B
    assert B % batch_block == 0, "batch_block must divide B"
    bb = batch_block
    nb = B // bb

    mm_dtype = jnp.bfloat16 if use_bf16 else q.dtype

    # Packed operand slabs: fewer DMA descriptors / VMEM buffers.
    w_stack = jnp.stack(
        [params["wq"], params["wk"], params["wv"], params["wfc"]],
        axis=0).astype(mm_dtype)                                     # (4,D,D)
    p_stack = jnp.concatenate(
        [params["bq"], params["bk"], params["bv"],
         params["gamma"], params["beta"]], axis=0)                   # (5,D) f32

    seq_spec = pl.BlockSpec((bb, L, D), lambda i: (i, 0, 0))

    out_shapes = [jax.ShapeDtypeStruct((B * L, D), q.dtype)]
    out_specs = [pl.BlockSpec((bb * L, D), lambda i: (i, 0))]
    if return_attn:
        out_shapes.append(jax.ShapeDtypeStruct((B, L, L), attn_dtype))
        out_specs.append(pl.BlockSpec((bb, L, L), lambda i: (i, 0, 0)))

    results = pl.pallas_call(
        functools.partial(_mha_kernel, return_attn),
        out_shape=out_shapes,
        grid_spec=pltpu.PrefetchScalarGridSpec(
            num_scalar_prefetch=0,
            grid=(nb,),
            in_specs=[
                seq_spec, seq_spec, seq_spec,
                pl.BlockSpec(memory_space=pl.ANY),        # weights: manual DMA
                pl.BlockSpec((5, D), lambda i: (0, 0)),
            ],
            out_specs=out_specs,
            scratch_shapes=[
                pltpu.VMEM((4, D, D), mm_dtype),          # single weight buffer
                pltpu.SemaphoreType.DMA,
            ],
        ),
        compiler_params=pltpu.CompilerParams(
            dimension_semantics=("parallel",),
            vmem_limit_bytes=32 * 1024 * 1024,
        ),
    )(q, k, v, w_stack, p_stack)

    out = results[0].reshape(B, L, D)
    attn = results[1] if return_attn else None
    return out, attn


def _reference(q, k, v, params):
    """Pure-JAX reference of the PyTorch forward (eval mode, mask=None)."""
    D = q.shape[-1]
    qp = q @ params["wq"] + params["bq"]
    kp = k @ params["wk"] + params["bk"]
    vp = v @ params["wv"] + params["bv"]
    scale = D ** -0.5
    scores = jnp.einsum("bld,bmd->blm", qp, kp) * scale
    attn = jax.nn.softmax(scores, axis=-1)
    ctx = jnp.einsum("blm,bmd->bld", attn, vp)
    proj = ctx @ params["wfc"]
    x = proj + q
    mean = jnp.mean(x, axis=-1, keepdims=True)
    var = jnp.mean((x - mean) ** 2, axis=-1, keepdims=True)
    xn = (x - mean) / jnp.sqrt(var + 1e-6)
    out = xn * params["gamma"] + params["beta"]
    return out, attn


if __name__ == "__main__":
    # Small shapes consistent with the module: model_dim=32 (n_head=8 divides),
    # seq=8, batch=2.
    B, L, D = 2, 8, 32

    key = jax.random.PRNGKey(0)
    ks = jax.random.split(key, 12)

    def lin_w(kk):  # (in, out) layout so kernel does x @ W (== torch x @ W.T)
        return jax.random.normal(kk, (D, D), jnp.float32) * (1.0 / np.sqrt(D))

    params = {
        "wq": lin_w(ks[0]), "bq": jax.random.normal(ks[1], (1, D), jnp.float32) * 0.02,
        "wk": lin_w(ks[2]), "bk": jax.random.normal(ks[3], (1, D), jnp.float32) * 0.02,
        "wv": lin_w(ks[4]), "bv": jax.random.normal(ks[5], (1, D), jnp.float32) * 0.02,
        "wfc": lin_w(ks[6]),
        "gamma": jnp.ones((1, D), jnp.float32)
                 + 0.1 * jax.random.normal(ks[7], (1, D), jnp.float32),
        "beta": 0.1 * jax.random.normal(ks[8], (1, D), jnp.float32),
    }

    q = jax.random.normal(ks[9], (B, L, D), jnp.float32)
    k = jax.random.normal(ks[10], (B, L, D), jnp.float32)
    v = jax.random.normal(ks[11], (B, L, D), jnp.float32)

    ref_out, ref_attn = _reference(q, k, v, params)
    ref_out_np, ref_attn_np = np.asarray(ref_out), np.asarray(ref_attn)

    # 1) f32 MXU path.  bb=B -> grid=(1,) (v5e/v6e recommendation);
    #    bb=B//2 -> grid=(2,) "parallel" (one step per v7x TensorCore).
    for bb in (B, max(B // 2, 1)):
        out, attn = multi_head_attention(q, k, v, params, batch_block=bb)
        out = jax.block_until_ready(out)
        attn = jax.block_until_ready(attn)
        assert out.shape == (B, L, D) and attn.shape == (B, L, L)
        np.testing.assert_allclose(np.asarray(out), ref_out_np,
                                   atol=5e-3, rtol=5e-3)
        np.testing.assert_allclose(np.asarray(attn), ref_attn_np,
                                   atol=5e-3, rtol=5e-3)

    # 2) bf16 MXU operands (f32 accumulation, f32 softmax/LayerNorm) with a
    #    bf16 attention output; looser tolerance for bf16 operand rounding.
    out_bf, attn_bf = multi_head_attention(q, k, v, params, batch_block=B,
                                           use_bf16=True,
                                           attn_dtype=jnp.bfloat16)
    out_bf = jax.block_until_ready(out_bf)
    attn_bf = jax.block_until_ready(attn_bf)
    np.testing.assert_allclose(np.asarray(out_bf), ref_out_np,
                               atol=5e-2, rtol=5e-2)
    np.testing.assert_allclose(np.asarray(attn_bf.astype(jnp.float32)),
                               ref_attn_np, atol=5e-2, rtol=5e-2)

    # 3) Attention output suppressed (drops the B*L*L HBM writeback).
    out_na, attn_na = multi_head_attention(q, k, v, params, batch_block=B,
                                           return_attn=False)
    out_na = jax.block_until_ready(out_na)
    assert attn_na is None
    np.testing.assert_allclose(np.asarray(out_na), ref_out_np,
                               atol=5e-3, rtol=5e-3)

    print("KERNEL_OK")
</pallas_src>

<mosaic_0001>
module attributes {stable_mosaic.version = 11 : i64} {
  func.func @_mha_kernel(%arg0: i32, %arg1: memref<2x8x32xf32, #tpu.memory_space<vmem>>, %arg2: memref<2x8x32xf32, #tpu.memory_space<vmem>>, %arg3: memref<2x8x32xf32, #tpu.memory_space<vmem>>, %arg4: memref<4x32x32xf32, #tpu.memory_space<any>>, %arg5: memref<5x32xf32, #tpu.memory_space<vmem>>, %arg6: memref<16x32xf32, #tpu.memory_space<vmem>>, %arg7: memref<2x8x8xf32, #tpu.memory_space<vmem>>, %arg8: memref<4x32x32xf32, #tpu.memory_space<vmem>>, %arg9: memref<!tpu.dma_semaphore, #tpu.memory_space<semaphore_mem>>) attributes {dimension_semantics = [#tpu.dimension_semantics<parallel>], iteration_bounds = array<i64: 1>, scalar_prefetch = 0 : i64, scratch_operands = 2 : i64, tpu.core_type = #tpu.core_type<tc>, window_params = [{transform_indices = @transform_0, window_bounds = array<i64: 2, 8, 32>}, {transform_indices = @transform_1, window_bounds = array<i64: 2, 8, 32>}, {transform_indices = @transform_2, window_bounds = array<i64: 2, 8, 32>}, {}, {pipeline_mode = #tpu.pipeline_mode<synchronous>, transform_indices = @transform_4, window_bounds = array<i64: 5, 32>}, {transform_indices = @transform_5, window_bounds = array<i64: 16, 32>}, {transform_indices = @transform_6, window_bounds = array<i64: 2, 8, 8>}]} {
    tpu.enqueue_dma source(%arg4 : memref<4x32x32xf32, #tpu.memory_space<any>>) target(%arg8 : memref<4x32x32xf32, #tpu.memory_space<vmem>>) target_semaphore(%arg9 : memref<!tpu.dma_semaphore, #tpu.memory_space<semaphore_mem>>)
    tpu.wait_dma2 semaphore(%arg9 : memref<!tpu.dma_semaphore, #tpu.memory_space<semaphore_mem>>) src(%arg4 : memref<4x32x32xf32, #tpu.memory_space<any>>) dst(%arg8 : memref<4x32x32xf32, #tpu.memory_space<vmem>>)
    %c0 = arith.constant 0 : index
    %c0_0 = arith.constant 0 : index
    %c0_1 = arith.constant 0 : index
    %0 = vector.load %arg1[%c0, %c0_0, %c0_1] : memref<2x8x32xf32, #tpu.memory_space<vmem>>, vector<2x8x32xf32>
    %1 = vector.shape_cast %0 : vector<2x8x32xf32> to vector<16x32xf32>
    %c0_2 = arith.constant 0 : index
    %c0_3 = arith.constant 0 : index
    %c0_4 = arith.constant 0 : index
    %2 = vector.load %arg2[%c0_2, %c0_3, %c0_4] : memref<2x8x32xf32, #tpu.memory_space<vmem>>, vector<2x8x32xf32>
    %3 = vector.shape_cast %2 : vector<2x8x32xf32> to vector<16x32xf32>
    %c0_5 = arith.constant 0 : index
    %c0_6 = arith.constant 0 : index
    %c0_7 = arith.constant 0 : index
    %4 = vector.load %arg3[%c0_5, %c0_6, %c0_7] : memref<2x8x32xf32, #tpu.memory_space<vmem>>, vector<2x8x32xf32>
    %5 = vector.shape_cast %4 : vector<2x8x32xf32> to vector<16x32xf32>
    %c0_8 = arith.constant 0 : index
    %c0_9 = arith.constant 0 : index
    %6 = vector.load %arg5[%c0_8, %c0_9] : memref<5x32xf32, #tpu.memory_space<vmem>>, vector<5x32xf32>
    %7 = vector.extract_strided_slice %6 {offsets = [0, 0], sizes = [1, 32], strides = [1, 1]} : vector<5x32xf32> to vector<1x32xf32>
    %8 = vector.extract_strided_slice %6 {offsets = [1, 0], sizes = [1, 32], strides = [1, 1]} : vector<5x32xf32> to vector<1x32xf32>
    %9 = vector.extract_strided_slice %6 {offsets = [2, 0], sizes = [1, 32], strides = [1, 1]} : vector<5x32xf32> to vector<1x32xf32>
    %10 = vector.extract_strided_slice %6 {offsets = [3, 0], sizes = [1, 32], strides = [1, 1]} : vector<5x32xf32> to vector<1x32xf32>
    %11 = vector.extract_strided_slice %6 {offsets = [4, 0], sizes = [1, 32], strides = [1, 1]} : vector<5x32xf32> to vector<1x32xf32>
    %c0_10 = arith.constant 0 : index
    %c0_11 = arith.constant 0 : index
    %c0_12 = arith.constant 0 : index
    %12 = vector.load %arg8[%c0_10, %c0_11, %c0_12] : memref<4x32x32xf32, #tpu.memory_space<vmem>>, vector<1x32x32xf32>
    %13 = vector.shape_cast %12 : vector<1x32x32xf32> to vector<32x32xf32>
    %cst = arith.constant dense<0.000000e+00> : vector<16x32xf32>
    %14 = tpu.matmul %1, %13, %cst {dimension_numbers = #tpu.dot_dimension_numbers<[1], [0], [0], [1], [0, 0, 1, 1], [], []>} : vector<16x32xf32>, vector<32x32xf32>, vector<16x32xf32> -> vector<16x32xf32>
    %15 = vector.broadcast %7 : vector<1x32xf32> to vector<16x32xf32>
    %16 = arith.addf %14, %15 : vector<16x32xf32>
    %cst_13 = arith.constant 0.176776692 : f32
    %17 = vector.broadcast %cst_13 : f32 to vector<16x32xf32>
    %18 = arith.mulf %16, %17 : vector<16x32xf32>
    %c1 = arith.constant 1 : index
    %c0_14 = arith.constant 0 : index
    %c0_15 = arith.constant 0 : index
    %19 = vector.load %arg8[%c1, %c0_14, %c0_15] : memref<4x32x32xf32, #tpu.memory_space<vmem>>, vector<1x32x32xf32>
    %20 = vector.shape_cast %19 : vector<1x32x32xf32> to vector<32x32xf32>
    %cst_16 = arith.constant dense<0.000000e+00> : vector<16x32xf32>
    %21 = tpu.matmul %3, %20, %cst_16 {dimension_numbers = #tpu.dot_dimension_numbers<[1], [0], [0], [1], [0, 0, 1, 1], [], []>} : vector<16x32xf32>, vector<32x32xf32>, vector<16x32xf32> -> vector<16x32xf32>
    %22 = vector.broadcast %8 : vector<1x32xf32> to vector<16x32xf32>
    %23 = arith.addf %21, %22 : vector<16x32xf32>
    %c2 = arith.constant 2 : index
    %c0_17 = arith.constant 0 : index
    %c0_18 = arith.constant 0 : index
    %24 = vector.load %arg8[%c2, %c0_17, %c0_18] : memref<4x32x32xf32, #tpu.memory_space<vmem>>, vector<1x32x32xf32>
    %25 = vector.shape_cast %24 : vector<1x32x32xf32> to vector<32x32xf32>
    %cst_19 = arith.constant dense<0.000000e+00> : vector<16x32xf32>
    %26 = tpu.matmul %5, %25, %cst_19 {dimension_numbers = #tpu.dot_dimension_numbers<[1], [0], [0], [1], [0, 0, 1, 1], [], []>} : vector<16x32xf32>, vector<32x32xf32>, vector<16x32xf32> -> vector<16x32xf32>
    %27 = vector.broadcast %9 : vector<1x32xf32> to vector<16x32xf32>
    %28 = arith.addf %26, %27 : vector<16x32xf32>
    %29 = vector.shape_cast %18 : vector<16x32xf32> to vector<2x8x32xf32>
    %30 = vector.shape_cast %23 : vector<16x32xf32> to vector<2x8x32xf32>
    %31 = vector.shape_cast %28 : vector<16x32xf32> to vector<2x8x32xf32>
    "tpu.trace_start"() <{level = 10 : i32, message = "bld,bmd->blm"}> : () -> ()
    %cst_20 = arith.constant dense<0.000000e+00> : vector<2x8x8xf32>
    %32 = tpu.matmul %29, %30, %cst_20 {dimension_numbers = #tpu.dot_dimension_numbers<[2], [2], [1], [1], [0, 0, 0, 1, 1, 1], [0], [0]>} : vector<2x8x32xf32>, vector<2x8x32xf32>, vector<2x8x8xf32> -> vector<2x8x8xf32>
    "tpu.trace_stop"() : () -> ()
    %cst_21 = arith.constant dense<0xFF800000> : vector<2x8xf32>
    %33 = vector.multi_reduction <maximumf>, %32, %cst_21 [2] : vector<2x8x8xf32> to vector<2x8xf32>
    %34 = vector.shape_cast %33 : vector<2x8xf32> to vector<2x8x1xf32>
    %35 = vector.broadcast %34 : vector<2x8x1xf32> to vector<2x8x8xf32>
    %36 = arith.subf %32, %35 : vector<2x8x8xf32>
    %37 = math.exp %36 : vector<2x8x8xf32>
    %cst_22 = arith.constant dense<0.000000e+00> : vector<2x8xf32>
    %38 = vector.multi_reduction <add>, %37, %cst_22 [2] : vector<2x8x8xf32> to vector<2x8xf32>
    %39 = vector.shape_cast %38 : vector<2x8xf32> to vector<2x8x1xf32>
    %40 = vector.broadcast %39 : vector<2x8x1xf32> to vector<2x8x8xf32>
    %41 = arith.divf %37, %40 : vector<2x8x8xf32>
    "tpu.trace_start"() <{level = 10 : i32, message = "blm,bmd->bld"}> : () -> ()
    %cst_23 = arith.constant dense<0.000000e+00> : vector<2x8x32xf32>
    %42 = tpu.matmul %41, %31, %cst_23 {dimension_numbers = #tpu.dot_dimension_numbers<[2], [1], [1], [2], [0, 0, 0, 1, 1, 2], [0], [0]>} : vector<2x8x8xf32>, vector<2x8x32xf32>, vector<2x8x32xf32> -> vector<2x8x32xf32>
    "tpu.trace_stop"() : () -> ()
    %43 = vector.shape_cast %42 : vector<2x8x32xf32> to vector<16x32xf32>
    %c3 = arith.constant 3 : index
    %c0_24 = arith.constant 0 : index
    %c0_25 = arith.constant 0 : index
    %44 = vector.load %arg8[%c3, %c0_24, %c0_25] : memref<4x32x32xf32, #tpu.memory_space<vmem>>, vector<1x32x32xf32>
    %45 = vector.shape_cast %44 : vector<1x32x32xf32> to vector<32x32xf32>
    %cst_26 = arith.constant dense<0.000000e+00> : vector<16x32xf32>
    %46 = tpu.matmul %43, %45, %cst_26 {dimension_numbers = #tpu.dot_dimension_numbers<[1], [0], [0], [1], [0, 0, 1, 1], [], []>} : vector<16x32xf32>, vector<32x32xf32>, vector<16x32xf32> -> vector<16x32xf32>
    %47 = arith.addf %46, %1 : vector<16x32xf32>
    %cst_27 = arith.constant dense<0.000000e+00> : vector<16xf32>
    %48 = vector.multi_reduction <add>, %47, %cst_27 [1] : vector<16x32xf32> to vector<16xf32>
    %49 = vector.shape_cast %48 : vector<16xf32> to vector<16x1xf32>
    %cst_28 = arith.constant 3.200000e+01 : f32
    %50 = vector.broadcast %cst_28 : f32 to vector<16x1xf32>
    %51 = arith.divf %49, %50 : vector<16x1xf32>
    %52 = vector.broadcast %51 : vector<16x1xf32> to vector<16x32xf32>
    %53 = arith.subf %47, %52 : vector<16x32xf32>
    %54 = arith.mulf %53, %53 : vector<16x32xf32>
    %cst_29 = arith.constant dense<0.000000e+00> : vector<16xf32>
    %55 = vector.multi_reduction <add>, %54, %cst_29 [1] : vector<16x32xf32> to vector<16xf32>
    %56 = vector.shape_cast %55 : vector<16xf32> to vector<16x1xf32>
    %cst_30 = arith.constant 3.200000e+01 : f32
    %57 = vector.broadcast %cst_30 : f32 to vector<16x1xf32>
    %58 = arith.divf %56, %57 : vector<16x1xf32>
    %cst_31 = arith.constant 9.99999997E-7 : f32
    %59 = vector.broadcast %cst_31 : f32 to vector<16x1xf32>
    %60 = arith.addf %58, %59 : vector<16x1xf32>
    %61 = math.rsqrt %60 : vector<16x1xf32>
    %62 = vector.broadcast %61 : vector<16x1xf32> to vector<16x32xf32>
    %63 = arith.mulf %53, %62 : vector<16x32xf32>
    %64 = vector.broadcast %10 : vector<1x32xf32> to vector<16x32xf32>
    %65 = arith.mulf %63, %64 : vector<16x32xf32>
    %66 = vector.broadcast %11 : vector<1x32xf32> to vector<16x32xf32>
    %67 = arith.addf %65, %66 : vector<16x32xf32>
    %c0_32 = arith.constant 0 : index
    %c0_33 = arith.constant 0 : index
    %68 = vector.load %arg6[%c0_32, %c0_33] : memref<16x32xf32, #tpu.memory_space<vmem>>, vector<16x32xf32>
    tpu.vector_store %arg6[%c0_32, %c0_33], %67 {strides = array<i32>} : memref<16x32xf32, #tpu.memory_space<vmem>>, vector<16x32xf32>,
    %c0_34 = arith.constant 0 : index
    %c0_35 = arith.constant 0 : index
    %c0_36 = arith.constant 0 : index
    %69 = vector.load %arg7[%c0_34, %c0_35, %c0_36] : memref<2x8x8xf32, #tpu.memory_space<vmem>>, vector<2x8x8xf32>
    tpu.vector_store %arg7[%c0_34, %c0_35, %c0_36], %41 {strides = array<i32>} : memref<2x8x8xf32, #tpu.memory_space<vmem>>, vector<2x8x8xf32>,
    return
  }
  func.func @transform_0(%arg0: i32) -> (i32, i32, i32) {
    %c0_i32 = arith.constant 0 : i32
    %c0_i32_0 = arith.constant 0 : i32
    %c0_i32_1 = arith.constant 0 : i32
    return %arg0, %c0_i32, %c0_i32_0 : i32, i32, i32
  }
  func.func @transform_1(%arg0: i32) -> (i32, i32, i32) {
    %c0_i32 = arith.constant 0 : i32
    %c0_i32_0 = arith.constant 0 : i32
    %c0_i32_1 = arith.constant 0 : i32
    return %arg0, %c0_i32, %c0_i32_0 : i32, i32, i32
  }
  func.func @transform_2(%arg0: i32) -> (i32, i32, i32) {
    %c0_i32 = arith.constant 0 : i32
    %c0_i32_0 = arith.constant 0 : i32
    %c0_i32_1 = arith.constant 0 : i32
    return %arg0, %c0_i32, %c0_i32_0 : i32, i32, i32
  }
  func.func @transform_4(%arg0: i32) -> (i32, i32) {
    %c0_i32 = arith.constant 0 : i32
    %c0_i32_0 = arith.constant 0 : i32
    %c0_i32_1 = arith.constant 0 : i32
    return %c0_i32, %c0_i32_0 : i32, i32
  }
  func.func @transform_5(%arg0: i32) -> (i32, i32) {
    %c0_i32 = arith.constant 0 : i32
    %c0_i32_0 = arith.constant 0 : i32
    return %arg0, %c0_i32 : i32, i32
  }
  func.func @transform_6(%arg0: i32) -> (i32, i32, i32) {
    %c0_i32 = arith.constant 0 : i32
    %c0_i32_0 = arith.constant 0 : i32
    %c0_i32_1 = arith.constant 0 : i32
    return %arg0, %c0_i32, %c0_i32_0 : i32, i32, i32
  }
}

</mosaic_0001>

<llo_original>
// kernel: tpu_custom_call.1
$region0: #{tpu_custom_call.1}
  #allocation0 [shape = 'u32[]', space=smem, size = 0x4, offset = 0x4, fixed_abs, tag = 'smem constant byte address 0x4 - core index']
  #allocation1 [shape = 'u32[72,128]{1,0:T(1,128)}', space=vmem, size = 0x9000, scoped, tag = 'internal scratch']
  #allocation2 [shape = 'f32[4,32,32]{2,1,0:T(8,128)}', space=vmem, size = 0x10000, scoped, tag = 'scratch operand']
  #allocation3 [shape = 's32[1]{0}', space=sflag, size = 0x4, scoped, tag = 'scratch operand']
  #allocation15 [shape = 's32[]', space=sflag, size = 0x4, offset = 0, fixed_abs, tag = 'sflag constant byte address 0x0 - dummy sync flag']
  #allocation16 [shape = 's32[]', space=sflag, size = 0x4, offset = 0, fixed_abs, tag = 'sflag constant byte address 0x0 - dummy sync flag']
  #allocation17 [shape = 'u32[]', space=smem, size = 0x4, offset = 0x44, fixed_abs, tag = 'smem constant byte address 0x44 - assertion arg 0']
  #allocation18 [shape = 'u32[]', space=smem, size = 0x4, offset = 0x48, fixed_abs, tag = 'smem constant byte address 0x48 - assertion arg 1']
  %s0 = inlined_call_operand.hbm [shape: f32[2,8,32], index: 0, kind: input, shape index: {}]
  %s1 = inlined_call_operand.hbm [shape: f32[2,8,32], index: 1, kind: input, shape index: {}]
  %s2 = inlined_call_operand.hbm [shape: f32[2,8,32], index: 2, kind: input, shape index: {}]
  %s3 = inlined_call_operand.hbm [shape: f32[4,32,32], index: 3, kind: input, shape index: {}]
  %s4 = inlined_call_operand.hbm [shape: f32[5,32], index: 4, kind: input, shape index: {}]
  %s5 = inlined_call_operand.hbm [shape: f32[16,32], index: 5, kind: output, shape index: {0}]
  %s6 = inlined_call_operand.hbm [shape: f32[2,8,8], index: 6, kind: output, shape index: {1}]
  %7 = xla_tuple %s5, %s6
  %s8 = sld [smem:[#allocation0]]
  $region54: #{tpu_custom_call.1} parent=0
    _
  %s10 = ssub.s32 1, %s8
  %s11 = scalar_select 0, %s10, %s8
  $region1: #{tpu_custom_call.1} parent=0
    #allocation4 [shape = 'u8[8192]{0}', space=vmem, size = 0x2000, scoped, tag = 'input window, operand 0, single buffered']
    #allocation5 [shape = 's32[1]{0}', space=sflag, size = 0x4, scoped, tag = 'scoped memory for tpu_custom_call.1']
    #allocation6 [shape = 's32[1]{0}', space=sflag, size = 0x4, scoped, tag = 'scoped memory for tpu_custom_call.1']
    #allocation7 [shape = 'u8[8192]{0}', space=vmem, size = 0x2000, scoped, tag = 'input window, operand 1, single buffered']
    #allocation8 [shape = 's32[1]{0}', space=sflag, size = 0x4, scoped, tag = 'scoped memory for tpu_custom_call.1']
    #allocation9 [shape = 'u8[8192]{0}', space=vmem, size = 0x2000, scoped, tag = 'input window, operand 2, single buffered']
    #allocation10 [shape = 'u8[4096]{0}', space=vmem, size = 0x1000, scoped, tag = 'input window, operand 4, single buffered']
    #allocation11 [shape = 's32[1]{0}', space=sflag, size = 0x4, scoped, tag = 'scoped memory for tpu_custom_call.1']
    #allocation12 [shape = 'u8[8192]{0}', space=vmem, size = 0x2000, scoped, tag = 'output window, operand 0, single buffered']
    #allocation13 [shape = 'u8[8192]{0}', space=vmem, size = 0x2000, scoped, tag = 'output window, operand 1, single buffered']
    #allocation14 [shape = 's32[1]{0}', space=sflag, size = 0x4, scoped, tag = 'scoped memory for tpu_custom_call.1']
    %12 = vsyncpa [#allocation5], 0
    %13 = vsyncpa [#allocation8], 0
    %14 = vsyncpa [#allocation11], 0
    %15 = vsyncpa [#allocation6], 0
    %16 = vsyncpa [#allocation14], 0
    // Predicated region
    $region2: #{tpu_custom_call.1} parent=1 // pred_check
      _
    $region3: #{tpu_custom_call.1} parent=1 // pred_check_branch
      %18 = sbr.rel (0) target = $region5
    $region4: #{tpu_custom_call.1} parent=1 // pred_region
      %20 = vsyncadd [#allocation5], 0
      %s21 = sshll.u32 %s0, 4
      %s22 = int_to_ptr.hbm [resolvable:$true] %s21
      %s23 = sshll.u32 [#allocation4], 4
      %s24 = int_to_ptr.vmem [resolvable:$true] %s23
      %29 = dma.hbm_to_vmem [thread:$0]  %s22, 256, %s24, [#allocation5], 128, 128, 8
    $region5: #{tpu_custom_call.1} parent=1 // pred_fallthru
      _
    // Predicated region
    $region6: #{tpu_custom_call.1} parent=1 // pred_check
      _
    $region7: #{tpu_custom_call.1} parent=1 // pred_check_branch
      %31 = sbr.rel (0) target = $region9
    $region8: #{tpu_custom_call.1} parent=1 // pred_region
      %33 = vsyncadd [#allocation8], 0
      %s34 = sshll.u32 %s1, 4
      %s35 = int_to_ptr.hbm [resolvable:$true] %s34
      %s36 = sshll.u32 [#allocation7], 4
      %s37 = int_to_ptr.vmem [resolvable:$true] %s36
      %42 = dma.hbm_to_vmem [thread:$0]  %s35, 256, %s37, [#allocation8], 128, 128, 8
    $region9: #{tpu_custom_call.1} parent=1 // pred_fallthru
      _
    // Predicated region
    $region10: #{tpu_custom_call.1} parent=1 // pred_check
      _
    $region11: #{tpu_custom_call.1} parent=1 // pred_check_branch
      %44 = sbr.rel (0) target = $region13
    $region12: #{tpu_custom_call.1} parent=1 // pred_region
      %46 = vsyncadd [#allocation8], 0
      %s47 = sshll.u32 %s2, 4
      %s48 = int_to_ptr.hbm [resolvable:$true] %s47
      %s49 = sshll.u32 [#allocation9], 4
      %s50 = int_to_ptr.vmem [resolvable:$true] %s49
      %55 = dma.hbm_to_vmem [thread:$0]  %s48, 256, %s50, [#allocation8], 128, 128, 8
    $region13: #{tpu_custom_call.1} parent=1 // pred_fallthru
      _
    // Predicated region
    $region14: #{tpu_custom_call.1} parent=1 // pred_check
      _
    $region15: #{tpu_custom_call.1} parent=1 // pred_check_branch
      %57 = sbr.rel (0) target = $region17
    $region16: #{tpu_custom_call.1} parent=1 // pred_region
      %59 = vsyncadd [#allocation11], 0
      %s61 = sshll.u32 %s4, 4
      %s62 = int_to_ptr.hbm [resolvable:$true] %s61
      %s63 = sshll.u32 [#allocation10], 4
      %s64 = int_to_ptr.vmem [resolvable:$true] %s63
      %66 = dma.hbm_to_vmem [thread:$0]  %s62, 128, %s64, [#allocation11]
    $region17: #{tpu_custom_call.1} parent=1 // pred_fallthru
      _
    // Predicated region
    $region18: #{tpu_custom_call.1} parent=1 // pred_check
      _
    $region19: #{tpu_custom_call.1} parent=1 // pred_check_branch
      %68 = sbr.rel (0) target = $region21
    $region20: #{tpu_custom_call.1} parent=1 // pred_region
      %70 = dma.done [#allocation5], 256
    $region21: #{tpu_custom_call.1} parent=1 // pred_fallthru
      _
    // Predicated region
    $region22: #{tpu_custom_call.1} parent=1 // pred_check
      _
    $region23: #{tpu_custom_call.1} parent=1 // pred_check_branch
      %72 = sbr.rel (0) target = $region25
    $region24: #{tpu_custom_call.1} parent=1 // pred_region
      %74 = dma.done [#allocation8], 256
    $region25: #{tpu_custom_call.1} parent=1 // pred_fallthru
      _
    // Predicated region
    $region26: #{tpu_custom_call.1} parent=1 // pred_check
      _
    $region27: #{tpu_custom_call.1} parent=1 // pred_check_branch
      %76 = sbr.rel (0) target = $region29
    $region28: #{tpu_custom_call.1} parent=1 // pred_region
      %78 = dma.done [#allocation8], 256
    $region29: #{tpu_custom_call.1} parent=1 // pred_fallthru
      _
    // Predicated region
    $region30: #{tpu_custom_call.1} parent=1 // pred_check
      _
    $region31: #{tpu_custom_call.1} parent=1 // pred_check_branch
      %80 = sbr.rel (0) target = $region33
    $region32: #{tpu_custom_call.1} parent=1 // pred_region
      %82 = dma.done [#allocation11], 128
    $region33: #{tpu_custom_call.1} parent=1 // pred_fallthru
      _
    // Predicated region
    $region34: #{tpu_custom_call.1} parent=1 // pred_check
      _
    $region35: #{tpu_custom_call.1} parent=1 // pred_check_branch
      %84 = sbr.rel target = $region37
    $region36: #{tpu_custom_call.1} parent=1 // pred_region
      %85 = sst [smem:[#allocation17]] [#allocation16]
      %86 = sst [smem:[#allocation18]] [#allocation15]
    $region37: #{tpu_custom_call.1} parent=1 // pred_fallthru
      _
    %88 = shalt.err (0)
    %s90 = sshll.u32 %s3, 4
    %s91 = int_to_ptr.hbm [resolvable:$true] %s90
    %s92 = sshll.u32 [#allocation2], 4
    %s93 = int_to_ptr.vmem [resolvable:$true] %s92
    %95 = dma.hbm_to_vmem [thread:$0]  %s91, 2048, %s93, [#allocation3]
    %s96 = smul.u32 4, 32
    %s97 = smul.u32 %s96, 1
    %s98 = sshll.u32 %s97, 4
    %99 = dma.done [#allocation3], %s98
    %v100 = vld [vmem:[#allocation4] sm:$0xff]
    %v101 = vld [vmem:[#allocation4 + $0x8] sm:$0xff]
    %v102 = vld [vmem:[#allocation7] sm:$0xff]
    %v103 = vld [vmem:[#allocation7 + $0x8] sm:$0xff]
    %v104 = vld [vmem:[#allocation9] sm:$0xff]
    %v105 = vld [vmem:[#allocation9 + $0x8] sm:$0xff]
    %v106 = vld [vmem:[#allocation10] sm:$0x1f]
    %v107 = vld [vmem:[#allocation2] sm:$0xff]
    %v108 = vld [vmem:[#allocation2 + $0x8] sm:$0xff]
    %v109 = vld [vmem:[#allocation2 + $0x10] sm:$0xff]
    %v110 = vld [vmem:[#allocation2 + $0x18] sm:$0xff]
    %v111 = vperm.slane %v106, 0
    %vm112 = vcmask 261120
    %v114 = vsel %vm112, %v100, 0
    %v117 = vsel %vm112, %v101, 0
    %119 = vmatpush.msra.mxu0 0.0
    %120 = vmatpush.msra.mxu0 0.0
    %121 = vmatpush.msra.mxu0 0.0
    %122 = vmatpush.msra.mxu0 0.0
    %123 = vmatpush.msra.mxu0 0.0
    %124 = vmatpush.msra.mxu0 0.0
    %125 = vmatpush.msra.mxu0 0.0
    %126 = vmatpush.msra.mxu0 0.0
    %127 = vmatpush.msra.mxu0 0.0
    %128 = vmatpush.msra.mxu0 0.0
    %129 = vmatpush.msra.mxu0 0.0
    %130 = vmatpush.msra.mxu0 0.0
    %131 = vmatpush.msra.mxu0 %v110
    %132 = vmatpush.msra.mxu0 %v109
    %133 = vmatpush.msra.mxu0 %v108
    %134 = vmatpush.msra.mxu0 %v107
    %135 = vmatmul.f32.gmra.mxu0 %v114
    %v136 = vpop.f32.mrf.mxu0
    %v137 = vadd.f32 %v111, %v136
    %138 = vmatmul.f32.gmra.mxu0 %v117
    %v139 = vpop.f32.mrf.mxu0
    %v140 = vadd.f32 %v111, %v139
    %141 = vdwg.mxu0
    %v142 = vmul.f32 %v137, 0.17677669
    %v143 = vmul.f32 %v140, 0.17677669
    %s144 = scalar_lea.vmem [#allocation2], 32
    %v145 = vld [vmem:[%s144] sm:$0xff]
    %v146 = vld [vmem:[%s144 + $0x8] sm:$0xff]
    %v147 = vld [vmem:[%s144 + $0x10] sm:$0xff]
    %v148 = vld [vmem:[%s144 + $0x18] sm:$0xff]
    %v149 = vperm.slane %v106, 1
    %v151 = vsel %vm112, %v102, 0
    %v154 = vsel %vm112, %v103, 0
    %156 = vmatpush.msra.mxu0 0.0
    %157 = vmatpush.msra.mxu0 0.0
    %158 = vmatpush.msra.mxu0 0.0
    %159 = vmatpush.msra.mxu0 0.0
    %160 = vmatpush.msra.mxu0 0.0
    %161 = vmatpush.msra.mxu0 0.0
    %162 = vmatpush.msra.mxu0 0.0
    %163 = vmatpush.msra.mxu0 0.0
    %164 = vmatpush.msra.mxu0 0.0
    %165 = vmatpush.msra.mxu0 0.0
    %166 = vmatpush.msra.mxu0 0.0
    %167 = vmatpush.msra.mxu0 0.0
    %168 = vmatpush.msra.mxu0 %v148
    %169 = vmatpush.msra.mxu0 %v147
    %170 = vmatpush.msra.mxu0 %v146
    %171 = vmatpush.msra.mxu0 %v145
    %172 = vmatmul.f32.gmra.mxu0 %v151
    %v173 = vpop.f32.mrf.mxu0
    %v174 = vadd.f32 %v149, %v173
    %175 = vmatmul.f32.gmra.mxu0 %v154
    %v176 = vpop.f32.mrf.mxu0
    %v177 = vadd.f32 %v149, %v176
    %178 = vdwg.mxu0
    %s179 = scalar_lea.vmem [#allocation2], 64
    %v180 = vld [vmem:[%s179] sm:$0xff]
    %v181 = vld [vmem:[%s179 + $0x8] sm:$0xff]
    %v182 = vld [vmem:[%s179 + $0x10] sm:$0xff]
    %v183 = vld [vmem:[%s179 + $0x18] sm:$0xff]
    %v184 = vperm.slane %v106, 2
    %v186 = vsel %vm112, %v104, 0
    %v189 = vsel %vm112, %v105, 0
    %191 = vmatpush.msra.mxu0 0.0
    %192 = vmatpush.msra.mxu0 0.0
    %193 = vmatpush.msra.mxu0 0.0
    %194 = vmatpush.msra.mxu0 0.0
    %195 = vmatpush.msra.mxu0 0.0
    %196 = vmatpush.msra.mxu0 0.0
    %197 = vmatpush.msra.mxu0 0.0
    %198 = vmatpush.msra.mxu0 0.0
    %199 = vmatpush.msra.mxu0 0.0
    %200 = vmatpush.msra.mxu0 0.0
    %201 = vmatpush.msra.mxu0 0.0
    %202 = vmatpush.msra.mxu0 0.0
    %203 = vmatpush.msra.mxu0 %v183
    %204 = vmatpush.msra.mxu0 %v182
    %205 = vmatpush.msra.mxu0 %v181
    %206 = vmatpush.msra.mxu0 %v180
    %207 = vmatmul.f32.gmra.mxu0 %v186
    %v208 = vpop.f32.mrf.mxu0
    %v209 = vadd.f32 %v184, %v208
    %210 = vmatmul.f32.gmra.mxu0 %v189
    %v211 = vpop.f32.mrf.mxu0
    %v212 = vadd.f32 %v184, %v211
    %213 = vdwg.mxu0
    %v215 = vsel %vm112, %v142, 0
    %v218 = vsel %vm112, %v174, 0
    %220 = vmatpush.xpose.msra.mxu0 0.0
    %221 = vmatpush.xpose.msra.mxu0 0.0
    %222 = vmatpush.xpose.msra.mxu0 0.0
    %223 = vmatpush.xpose.msra.mxu0 0.0
    %224 = vmatpush.xpose.msra.mxu0 0.0
    %225 = vmatpush.xpose.msra.mxu0 0.0
    %226 = vmatpush.xpose.msra.mxu0 0.0
    %227 = vmatpush.xpose.msra.mxu0 0.0
    %228 = vmatpush.xpose.msra.mxu0 0.0
    %229 = vmatpush.xpose.msra.mxu0 0.0
    %230 = vmatpush.xpose.msra.mxu0 0.0
    %231 = vmatpush.xpose.msra.mxu0 0.0
    %232 = vmatpush.xpose.msra.mxu0 0.0
    %233 = vmatpush.xpose.msra.mxu0 0.0
    %234 = vmatpush.xpose.msra.mxu0 0.0
    %235 = vmatpush.xpose.msra.mxu0 %v218
    %236 = vmatmul.f32.gmra.mxu0 %v215
    %v237 = vpop.f32.mrf.mxu0
    %v238 = vadd.f32 0.0, %v237
    %239 = vdwg.mxu0
    %v241 = vsel %vm112, %v143, 0
    %v244 = vsel %vm112, %v177, 0
    %246 = vmatpush.xpose.msra.mxu0 0.0
    %247 = vmatpush.xpose.msra.mxu0 0.0
    %248 = vmatpush.xpose.msra.mxu0 0.0
    %249 = vmatpush.xpose.msra.mxu0 0.0
    %250 = vmatpush.xpose.msra.mxu0 0.0
    %251 = vmatpush.xpose.msra.mxu0 0.0
    %252 = vmatpush.xpose.msra.mxu0 0.0
    %253 = vmatpush.xpose.msra.mxu0 0.0
    %254 = vmatpush.xpose.msra.mxu0 0.0
    %255 = vmatpush.xpose.msra.mxu0 0.0
    %256 = vmatpush.xpose.msra.mxu0 0.0
    %257 = vmatpush.xpose.msra.mxu0 0.0
    %258 = vmatpush.xpose.msra.mxu0 0.0
    %259 = vmatpush.xpose.msra.mxu0 0.0
    %260 = vmatpush.xpose.msra.mxu0 0.0
    %261 = vmatpush.xpose.msra.mxu0 %v244
    %262 = vmatmul.f32.gmra.mxu0 %v241
    %v263 = vpop.f32.mrf.mxu0
    %v264 = vadd.f32 0.0, %v263
    %265 = vdwg.mxu0
    %vm266 = vcmask 64512
    %v267 = vsel %vm266, %v238, -inf
    %268 = vmax.xlane.f32.xlu0 %v267
    %v269 = vpop.xlane.xlu0 %268
    %v270 = vsel %vm266, %v264, -inf
    %271 = vmax.xlane.f32.xlu0 %v270
    %v272 = vpop.xlane.xlu0 %271
    %v273 = vsub.f32 %v238, %v269
    %v274 = vsub.f32 %v264, %v272
    %v275 = vmul.f32 %v273, 1.442695
    %v276 = vpow.pop %v275
    %v277 = vmul.f32 %v274, 1.442695
    %v278 = vpow.pop %v277
    %v279 = vsel %vm266, %v276, 0.0
    %280 = vadd.xlane.f32.xlu0 %v279
    %v281 = vpop.xlane.xlu0 %280
    %v282 = vsel %vm266, %v278, 0.0
    %283 = vadd.xlane.f32.xlu0 %v282
    %v284 = vpop.xlane.xlu0 %283
    %v285 = vrcp.pop %v281
    %v286 = vmul.f32 %v281, %v285
    %v287 = vsub.f32 1.0, %v286
    %v288 = vmul.f32 %v285, %v287
    %v289 = vadd.f32 %v285, %v288
    %vm290 = vweird.f32 %v281
    %vm291 = vweird.f32 %v285
    %vm292 = vmor %vm290, %vm291
    %v293 = vsel %vm292, %v285, %v289
    %v294 = vand.u32 2147483647, %v281
    %vm295 = vcmp.eq.f32.partialorder %v294, 8.507059e+37
    %v296 = vand.u32 %v281, 2147483648
    %v297 = vor.u32 1.1754944e-38, %v296
    %v298 = vsel %vm295, %v297, %v293
    %v299 = vmul.f32 %v276, %v298
    %v300 = vrcp.pop %v284
    %v301 = vmul.f32 %v284, %v300
    %v302 = vsub.f32 1.0, %v301
    %v303 = vmul.f32 %v300, %v302
    %v304 = vadd.f32 %v300, %v303
    %vm305 = vweird.f32 %v284
    %vm306 = vweird.f32 %v300
    %vm307 = vmor %vm305, %vm306
    %v308 = vsel %vm307, %v300, %v304
    %v309 = vand.u32 2147483647, %v284
    %vm310 = vcmp.eq.f32.partialorder %v309, 8.507059e+37
    %v311 = vand.u32 %v284, 2147483648
    %v312 = vor.u32 1.1754944e-38, %v311
    %v313 = vsel %vm310, %v312, %v308
    %v314 = vmul.f32 %v278, %v313
    %v316 = vsel %vm266, %v299, 0
    %318 = vmatpush.msra.mxu0 0.0
    %319 = vmatpush.msra.mxu0 0.0
    %320 = vmatpush.msra.mxu0 0.0
    %321 = vmatpush.msra.mxu0 0.0
    %322 = vmatpush.msra.mxu0 0.0
    %323 = vmatpush.msra.mxu0 0.0
    %324 = vmatpush.msra.mxu0 0.0
    %325 = vmatpush.msra.mxu0 0.0
    %326 = vmatpush.msra.mxu0 0.0
    %327 = vmatpush.msra.mxu0 0.0
    %328 = vmatpush.msra.mxu0 0.0
    %329 = vmatpush.msra.mxu0 0.0
    %330 = vmatpush.msra.mxu0 0.0
    %331 = vmatpush.msra.mxu0 0.0
    %332 = vmatpush.msra.mxu0 0.0
    %333 = vmatpush.msra.mxu0 %v209
    %334 = vmatmul.f32.gmra.mxu0 %v316
    %v335 = vpop.f32.mrf.mxu0
    %v336 = vadd.f32 0.0, %v335
    %337 = vdwg.mxu0
    %v339 = vsel %vm266, %v314, 0
    %341 = vmatpush.msra.mxu0 0.0
    %342 = vmatpush.msra.mxu0 0.0
    %343 = vmatpush.msra.mxu0 0.0
    %344 = vmatpush.msra.mxu0 0.0
    %345 = vmatpush.msra.mxu0 0.0
    %346 = vmatpush.msra.mxu0 0.0
    %347 = vmatpush.msra.mxu0 0.0
    %348 = vmatpush.msra.mxu0 0.0
    %349 = vmatpush.msra.mxu0 0.0
    %350 = vmatpush.msra.mxu0 0.0
    %351 = vmatpush.msra.mxu0 0.0
    %352 = vmatpush.msra.mxu0 0.0
    %353 = vmatpush.msra.mxu0 0.0
    %354 = vmatpush.msra.mxu0 0.0
    %355 = vmatpush.msra.mxu0 0.0
    %356 = vmatpush.msra.mxu0 %v212
    %357 = vmatmul.f32.gmra.mxu0 %v339
    %v358 = vpop.f32.mrf.mxu0
    %v359 = vadd.f32 0.0, %v358
    %360 = vdwg.mxu0
    %s361 = scalar_lea.vmem [#allocation2], 96
    %v362 = vld [vmem:[%s361] sm:$0xff]
    %v363 = vld [vmem:[%s361 + $0x8] sm:$0xff]
    %v364 = vld [vmem:[%s361 + $0x10] sm:$0xff]
    %v365 = vld [vmem:[%s361 + $0x18] sm:$0xff]
    %v367 = vsel %vm112, %v336, 0
    %v370 = vsel %vm112, %v359, 0
    %372 = vmatpush.msra.mxu0 0.0
    %373 = vmatpush.msra.mxu0 0.0
    %374 = vmatpush.msra.mxu0 0.0
    %375 = vmatpush.msra.mxu0 0.0
    %376 = vmatpush.msra.mxu0 0.0
    %377 = vmatpush.msra.mxu0 0.0
    %378 = vmatpush.msra.mxu0 0.0
    %379 = vmatpush.msra.mxu0 0.0
    %380 = vmatpush.msra.mxu0 0.0
    %381 = vmatpush.msra.mxu0 0.0
    %382 = vmatpush.msra.mxu0 0.0
    %383 = vmatpush.msra.mxu0 0.0
    %384 = vmatpush.msra.mxu0 %v365
    %385 = vmatpush.msra.mxu0 %v364
    %386 = vmatpush.msra.mxu0 %v363
    %387 = vmatpush.msra.mxu0 %v362
    %388 = vmatmul.f32.gmra.mxu0 %v367
    %v389 = vpop.f32.mrf.mxu0
    %v390 = vadd.f32 %v100, %v389
    %391 = vmatmul.f32.gmra.mxu0 %v370
    %v392 = vpop.f32.mrf.mxu0
    %v393 = vadd.f32 %v101, %v392
    %394 = vdwg.mxu0
    %v395 = vsel %vm112, %v390, 0.0
    %396 = vadd.xlane.f32.xlu0 %v395
    %v397 = vpop.xlane.xlu0 %396
    %v398 = vsel %vm112, %v393, 0.0
    %399 = vadd.xlane.f32.xlu0 %v398
    %v400 = vpop.xlane.xlu0 %399
    %v401 = vrcp.pop 32.0
    %v402 = vmul.f32 32.0, %v401
    %v403 = vsub.f32 1.0, %v402
    %v404 = vmul.f32 %v401, %v403
    %v405 = vadd.f32 %v401, %v404
    %vm406 = vweird.f32 %v401
    %v407 = vsel %vm406, %v401, %v405
    %v408 = vmul.f32 %v397, %v407
    %v409 = vmul.f32 %v400, %v407
    %v410 = vsub.f32 %v390, %v408
    %v411 = vsub.f32 %v393, %v409
    %v412 = vmul.f32 %v410, %v410
    %v413 = vmul.f32 %v411, %v411
    %v414 = vsel %vm112, %v412, 0.0
    %415 = vadd.xlane.f32.xlu0 %v414
    %v416 = vpop.xlane.xlu0 %415
    %v417 = vsel %vm112, %v413, 0.0
    %418 = vadd.xlane.f32.xlu0 %v417
    %v419 = vpop.xlane.xlu0 %418
    %v420 = vmul.f32 %v416, %v407
    %v421 = vmul.f32 %v419, %v407
    %v422 = vadd.f32 %v420, 1e-06
    %v423 = vadd.f32 %v421, 1e-06
    %v424 = vrsqrt.pop %v422
    %v425 = vmul.f32 %v424, %v422
    %v426 = vmul.f32 %v425, %v424
    %v427 = vmul.f32 0.5, %v426
    %v428 = vsub.f32 1.5, %v427
    %v429 = vmul.f32 %v424, %v428
    %vm430 = vweird.f32 %v422
    %vm431 = vweird.f32 %v424
    %vm432 = vmor %vm430, %vm431
    %v433 = vsel %vm432, %v424, %v429
    %v434 = vrsqrt.pop %v423
    %v435 = vmul.f32 %v434, %v423
    %v436 = vmul.f32 %v435, %v434
    %v437 = vmul.f32 0.5, %v436
    %v438 = vsub.f32 1.5, %v437
    %v439 = vmul.f32 %v434, %v438
    %vm440 = vweird.f32 %v423
    %vm441 = vweird.f32 %v434
    %vm442 = vmor %vm440, %vm441
    %v443 = vsel %vm442, %v434, %v439
    %v444 = vmul.f32 %v410, %v433
    %v445 = vmul.f32 %v411, %v443
    %v446 = vperm.slane %v106, 3
    %v447 = vmul.f32 %v444, %v446
    %v448 = vmul.f32 %v445, %v446
    %v449 = vperm.slane %v106, 4
    %v450 = vadd.f32 %v447, %v449
    %v451 = vadd.f32 %v448, %v449
    %452 = vst.msk [vmem:[#allocation12] sm:$0xff] %vm112, %v450
    %453 = vst.msk [vmem:[#allocation12 + $0x8] sm:$0xff] %vm112, %v451
    %454 = vst.msk [vmem:[#allocation13] sm:$0xff] %vm266, %v299
    %455 = vst.msk [vmem:[#allocation13 + $0x8] sm:$0xff] %vm266, %v314
    // Predicated region
    $region38: #{tpu_custom_call.1} parent=1 // pred_check
      _
    $region39: #{tpu_custom_call.1} parent=1 // pred_check_branch
      %457 = sbr.rel (0) target = $region41
    $region40: #{tpu_custom_call.1} parent=1 // pred_region
      %459 = vsyncadd [#allocation6], 0
      %s460 = sshll.u32 [#allocation12], 4
      %s461 = int_to_ptr.vmem [resolvable:$true] %s460
      %s462 = sshll.u32 %s5, 4
      %s463 = int_to_ptr.hbm [resolvable:$true] %s462
      %468 = dma.vmem_to_hbm [thread:$0]  %s461, 256, %s463, [#allocation6], 128, 128, 8
    $region41: #{tpu_custom_call.1} parent=1 // pred_fallthru
      _
    // Predicated region
    $region42: #{tpu_custom_call.1} parent=1 // pred_check
      _
    $region43: #{tpu_custom_call.1} parent=1 // pred_check_branch
      %470 = sbr.rel (0) target = $region45
    $region44: #{tpu_custom_call.1} parent=1 // pred_region
      %472 = vsyncadd [#allocation14], 0
      %s473 = sshll.u32 [#allocation13], 4
      %s474 = int_to_ptr.vmem [resolvable:$true] %s473
      %s475 = sshll.u32 %s6, 4
      %s476 = int_to_ptr.hbm [resolvable:$true] %s475
      %481 = dma.vmem_to_hbm [thread:$0]  %s474, 256, %s476, [#allocation14], 128, 128, 8
    $region45: #{tpu_custom_call.1} parent=1 // pred_fallthru
      _
    // Predicated region
    $region46: #{tpu_custom_call.1} parent=1 // pred_check
      _
    $region47: #{tpu_custom_call.1} parent=1 // pred_check_branch
      %483 = sbr.rel (0) target = $region49
    $region48: #{tpu_custom_call.1} parent=1 // pred_region
      %485 = dma.done [#allocation6], 256
    $region49: #{tpu_custom_call.1} parent=1 // pred_fallthru
      _
    // Predicated region
    $region50: #{tpu_custom_call.1} parent=1 // pred_check
      _
    $region51: #{tpu_custom_call.1} parent=1 // pred_check_branch
      %487 = sbr.rel (0) target = $region53
    $region52: #{tpu_custom_call.1} parent=1 // pred_region
      %489 = dma.done [#allocation14], 256
    $region53: #{tpu_custom_call.1} parent=1 // pred_fallthru
      _
    %490 = vsyncpa [#allocation5], 1
    %491 = vsyncpa [#allocation8], 1
    %492 = vsyncpa [#allocation11], 1
    %493 = vsyncpa [#allocation6], 1
    %494 = vsyncpa [#allocation14], 1
  %495 = vsyncmov [#allocation3]
  %s496 = vpop.sfrf %495
  %p497 = scmp.eq.s32.totalorder %s496, 0
  %p498 = pneg %p497
  %500 = shalt.err (%p498)

</llo_original>
